<compile_context>
chip_gen: v6e
topology: v6e:2x2x1
jax: 0.10.0
libtpu: 0.0.40
codegen_flags: <defaults>
</compile_context>

<pallas_src>
from functools import partial

import jax
import jax.numpy as jnp
from jax.experimental import pallas as pl
from jax.experimental.pallas import tpu as pltpu


def _lse_sum_kernel(n_total, tile_n, chunk, n_chunks, tiles_per_core,
                    x_ref, out_ref, acc_ref):
    """Accumulate sum of masked per-row log-sum-exp for one batch tile.

    x_ref:   (tile_n, C) logits block (VMEM), any float dtype
    out_ref: (1, 8, 128) f32 per-core partial-sum block (resident across j)
    acc_ref: (chunk, 1) f32 VMEM column accumulator (elementwise across chunks/tiles)
    """
    i = pl.program_id(0)          # core axis  (parallel)
    j = pl.program_id(1)          # tile axis  (arbitrary / reduction)

    @pl.when(j == 0)
    def _init():
        acc_ref[...] = jnp.zeros_like(acc_ref)

    base_row = (i * tiles_per_core + j) * tile_n

    def accum(x, r0):
        x = x.astype(jnp.float32)                                   # (rows, C)
        m = jnp.max(x, axis=-1, keepdims=True)                      # (rows, 1)
        lse = jnp.log(jnp.sum(jnp.exp(x - m), axis=-1, keepdims=True)) + m
        row = base_row + r0 + jax.lax.broadcasted_iota(jnp.int32, (x.shape[0], 1), 0)
        # Mask padded tail rows / OOB (clamped) blocks BEFORE accumulating.
        acc_ref[...] += jnp.where(row < n_total, lse, jnp.float32(0.0))

    if n_chunks == 1:
        accum(x_ref[...], 0)
    else:
        def body(ci, carry):
            r0 = pl.multiple_of(ci * chunk, chunk)
            accum(x_ref[pl.ds(r0, chunk), :], r0)
            return carry
        unroll = True if n_chunks <= 8 else 2
        jax.lax.fori_loop(0, n_chunks, body, 0, unroll=unroll)

    @pl.when(j == pl.num_programs(1) - 1)
    def _finalize():
        # One cross-lane/sublane reduce per core for the whole kernel.
        out_ref[...] = jnp.zeros_like(out_ref) + jnp.sum(acc_ref[...])


def _vmem_capacity_bytes():
    try:
        info = pltpu.get_tpu_info()
        for name in ("vmem_capacity_bytes", "vmem_size_bytes", "vmem_bytes"):
            v = getattr(info, name, None)
            if v:
                return int(v)
    except Exception:
        pass
    return 128 * 1024 * 1024


def _choose_tiling(n, c, itemsize, vmem_cap_bytes):
    """Return (tile_n, chunk) with chunk | tile_n.

    Per-buffer budget: ~4 MiB on 64 MiB-VMEM parts (v7x), ~8 MiB on 128 MiB
    parts (v5e/v6e) where big streaming tiles (>~2 MiB) hit >=85% of HBM
    roofline and amortize the ~0.35us/step grid overhead.
    """
    mib = 1 << 20
    budget = 4 * mib if vmem_cap_bytes <= 64 * mib else 8 * mib
    if n <= 512:
        return n, n                      # single block (full dims is always legal)
    rows = max(8, budget // max(1, c * itemsize))
    if rows < 256:                       # very wide C: small tile, single chunk
        t = max(8, (rows // 8) * 8)
        return t, t
    t = min((rows // 256) * 256, (n // 256) * 256)
    return t, 256


def hashimoto_loss(logits, target, eta, *, tile_n=None, chunk=None, num_cores=None):
    """logits: (N, C) float (f32 or bf16); target: (N,) int class ids; eta: float."""
    n, c = logits.shape
    itemsize = jnp.dtype(logits.dtype).itemsize
    vmem_cap = _vmem_capacity_bytes()

    if tile_n is None:
        tile_n, auto_chunk = _choose_tiling(n, c, itemsize, vmem_cap)
    else:
        tile_n = int(max(1, min(tile_n, n)))
        auto_chunk = tile_n if tile_n <= 512 else 256
        if tile_n % auto_chunk:
            auto_chunk = tile_n
    chunk = int(auto_chunk if chunk is None else chunk)
    if tile_n % chunk:
        chunk = tile_n
    n_chunks = tile_n // chunk

    num_tiles = pl.cdiv(n, tile_n)
    if num_cores is None:
        num_cores = 2 if num_tiles >= 2 else 1
    num_cores = max(1, min(int(num_cores), num_tiles))
    tpc = pl.cdiv(num_tiles, num_cores)     # tiles per core (last core may idle)

    # VMEM request from actual footprint: 2x double-buffered logits block,
    # ~3 chunk-sized f32 temporaries, lane-padded column accumulator, headroom.
    tile_bytes = tile_n * c * itemsize
    need = 2 * tile_bytes + 3 * chunk * c * 4 + chunk * 128 * 4 + (4 << 20)
    vmem_limit = int(min(max(need, 16 << 20), max(32 << 20, (vmem_cap * 3) // 4)))

    kernel = partial(_lse_sum_kernel, n, tile_n, chunk, n_chunks, tpc)

    partials = pl.pallas_call(
        kernel,
        out_shape=jax.ShapeDtypeStruct((num_cores, 8, 128), jnp.float32),
        grid=(num_cores, tpc),
        in_specs=[
            # Clamp OOB block indices of the short core; those rows are masked.
            pl.BlockSpec((tile_n, c),
                         lambda i, j: (jnp.minimum(i * tpc + j, num_tiles - 1), 0)),
        ],
        out_specs=pl.BlockSpec((1, 8, 128), lambda i, j: (i, 0, 0)),
        scratch_shapes=[pltpu.VMEM((chunk, 1), jnp.float32)],
        compiler_params=pltpu.CompilerParams(
            dimension_semantics=("parallel", "arbitrary"),
            vmem_limit_bytes=vmem_limit,
        ),
    )(logits)

    # Wrapper-side: O(N) target-logit gather + scalar finalize.
    sum_lse = jnp.sum(partials[:, 0, 0])
    picked = jnp.take_along_axis(logits, target.astype(jnp.int32)[:, None], axis=-1)
    sum_picked = jnp.sum(picked.astype(jnp.float32))
    loss = (sum_lse - sum_picked) / jnp.float32(n)
    d = jnp.maximum(loss - jnp.float32(eta), jnp.float32(0.0))
    return d * d + jnp.float32(eta) ** 2


def _reference(logits, target, eta):
    # Pure-JAX reference of the torch semantics.
    logp = jax.nn.log_softmax(logits.astype(jnp.float32), axis=-1)
    nll = -jnp.take_along_axis(logp, target[:, None].astype(jnp.int32), axis=-1)[:, 0]
    loss = jnp.mean(nll)
    d = jnp.maximum(loss - eta, 0.0)
    return d * d + eta ** 2


if __name__ == "__main__":
    key = jax.random.PRNGKey(0)
    k1, k2, k3, k4 = jax.random.split(key, 4)
    eta = 0.3

    # Case 1: auto-tiling single-block path (N=20 not a multiple of 8).
    N1, C1 = 20, 32
    x1 = jax.random.normal(k1, (N1, C1), dtype=jnp.float32)
    t1 = jax.random.randint(k2, (N1,), 0, C1, dtype=jnp.int32)
    out1 = jax.block_until_ready(hashimoto_loss(x1, t1, eta))
    ref1 = _reference(x1, t1, eta)
    assert jnp.allclose(out1, ref1, rtol=1e-5, atol=1e-5), (out1, ref1)

    # Case 1b: relu floor active (loss < eta => result == eta**2).
    out1b = jax.block_until_ready(hashimoto_loss(x1, t1, 10.0))
    ref1b = _reference(x1, t1, 10.0)
    assert jnp.allclose(out1b, ref1b, rtol=1e-5, atol=1e-5), (out1b, ref1b)

    # Case 2: multi-tile grid, 2 "cores", masked partial tail + clamped OOB block.
    N2, C2 = 20, 128
    x2 = jax.random.normal(k3, (N2, C2), dtype=jnp.float32)
    t2 = jax.random.randint(k4, (N2,), 0, C2, dtype=jnp.int32)
    out2 = jax.block_until_ready(hashimoto_loss(x2, t2, eta, tile_n=8, num_cores=2))
    ref2 = _reference(x2, t2, eta)
    assert jnp.allclose(out2, ref2, rtol=1e-5, atol=1e-5), (out2, ref2)

    # Case 3: bf16 logits stream (half the HBM traffic), f32 accumulation in-kernel.
    out3 = jax.block_until_ready(
        hashimoto_loss(x2.astype(jnp.bfloat16), t2, eta, tile_n=8, num_cores=2))
    ref3 = _reference(x2.astype(jnp.bfloat16).astype(jnp.float32), t2, eta)
    assert jnp.allclose(out3, ref3, rtol=1e-4, atol=1e-4), (out3, ref3)

    # Case 4: exercise the in-kernel strip-mining fori_loop (n_chunks > 1).
    N4, C4 = 64, 128
    k5, k6 = jax.random.split(k1)
    x4 = jax.random.normal(k5, (N4, C4), dtype=jnp.float32)
    t4 = jax.random.randint(k6, (N4,), 0, C4, dtype=jnp.int32)
    out4 = jax.block_until_ready(
        hashimoto_loss(x4, t4, eta, tile_n=32, chunk=8, num_cores=2))
    ref4 = _reference(x4, t4, eta)
    assert jnp.allclose(out4, ref4, rtol=1e-5, atol=1e-5), (out4, ref4)

    print("KERNEL_OK")
</pallas_src>

<mosaic_0001>
module attributes {stable_mosaic.version = 11 : i64} {
  func.func @_lse_sum_kernel(%arg0: i32, %arg1: i32, %arg2: memref<20x32xf32, #tpu.memory_space<vmem>>, %arg3: memref<1x8x128xf32, #tpu.memory_space<vmem>>, %arg4: memref<20x1xf32, #tpu.memory_space<vmem>>) attributes {dimension_semantics = [#tpu.dimension_semantics<parallel>, #tpu.dimension_semantics<arbitrary>], iteration_bounds = array<i64: 1, 1>, scalar_prefetch = 0 : i64, scratch_operands = 1 : i64, tpu.core_type = #tpu.core_type<tc>, window_params = [{transform_indices = @transform_0, window_bounds = array<i64: 20, 32>}, {transform_indices = @transform_1, window_bounds = array<i64: 1, 8, 128>}]} {
    %c0_i32 = arith.constant 0 : i32
    %0 = arith.cmpi eq, %arg1, %c0_i32 : i32
    %1 = arith.extui %0 : i1 to i32
    %c0_i32_0 = arith.constant 0 : i32
    %2 = arith.cmpi ne, %1, %c0_i32_0 : i32
    scf.if %2 {
      %cst_12 = arith.constant 0.000000e+00 : f32
      %30 = vector.broadcast %cst_12 : f32 to vector<20x1xf32>
      %c0_13 = arith.constant 0 : index
      %c0_14 = arith.constant 0 : index
      %31 = vector.load %arg4[%c0_13, %c0_14] : memref<20x1xf32, #tpu.memory_space<vmem>>, vector<20x1xf32>
      tpu.vector_store %arg4[%c0_13, %c0_14], %30 {strides = array<i32>} : memref<20x1xf32, #tpu.memory_space<vmem>>, vector<20x1xf32>,
    } else {
    }
    %c1_i32 = arith.constant 1 : i32
    %3 = arith.muli %arg0, %c1_i32 : i32
    %4 = arith.addi %3, %arg1 : i32
    %c20_i32 = arith.constant 20 : i32
    %5 = arith.muli %4, %c20_i32 : i32
    %c0 = arith.constant 0 : index
    %c0_1 = arith.constant 0 : index
    %6 = vector.load %arg2[%c0, %c0_1] : memref<20x32xf32, #tpu.memory_space<vmem>>, vector<20x32xf32>
    %cst = arith.constant dense<0xFF800000> : vector<20xf32>
    %7 = vector.multi_reduction <maximumf>, %6, %cst [1] : vector<20x32xf32> to vector<20xf32>
    %8 = vector.shape_cast %7 : vector<20xf32> to vector<20x1xf32>
    %9 = vector.broadcast %8 : vector<20x1xf32> to vector<20x32xf32>
    %10 = arith.subf %6, %9 : vector<20x32xf32>
    %11 = math.exp %10 : vector<20x32xf32>
    %cst_2 = arith.constant dense<0.000000e+00> : vector<20xf32>
    %12 = vector.multi_reduction <add>, %11, %cst_2 [1] : vector<20x32xf32> to vector<20xf32>
    %13 = vector.shape_cast %12 : vector<20xf32> to vector<20x1xf32>
    %14 = math.log %13 : vector<20x1xf32>
    %15 = arith.addf %14, %8 : vector<20x1xf32>
    %c0_i32_3 = arith.constant 0 : i32
    %16 = arith.addi %5, %c0_i32_3 : i32
    %17 = tpu.iota {dimensions = array<i32: 0>} : vector<20x1xi32>
    %18 = vector.broadcast %16 : i32 to vector<20x1xi32>
    %19 = arith.addi %18, %17 : vector<20x1xi32>
    %c0_4 = arith.constant 0 : index
    %c0_5 = arith.constant 0 : index
    %20 = vector.load %arg4[%c0_4, %c0_5] : memref<20x1xf32, #tpu.memory_space<vmem>>, vector<20x1xf32>
    %c20_i32_6 = arith.constant 20 : i32
    %21 = vector.broadcast %c20_i32_6 : i32 to vector<20x1xi32>
    %22 = arith.cmpi slt, %19, %21 : vector<20x1xi32>
    %cst_7 = arith.constant 0.000000e+00 : f32
    %23 = vector.broadcast %cst_7 : f32 to vector<20x1xf32>
    %24 = arith.select %22, %15, %23 : vector<20x1xi1>, vector<20x1xf32>
    %25 = arith.addf %20, %24 : vector<20x1xf32>
    %c0_8 = arith.constant 0 : index
    %c0_9 = arith.constant 0 : index
    %26 = vector.load %arg4[%c0_8, %c0_9] : memref<20x1xf32, #tpu.memory_space<vmem>>, vector<20x1xf32>
    tpu.vector_store %arg4[%c0_8, %c0_9], %25 {strides = array<i32>} : memref<20x1xf32, #tpu.memory_space<vmem>>, vector<20x1xf32>,
    %c0_i32_10 = arith.constant 0 : i32
    %27 = arith.cmpi eq, %arg1, %c0_i32_10 : i32
    %28 = arith.extui %27 : i1 to i32
    %c0_i32_11 = arith.constant 0 : i32
    %29 = arith.cmpi ne, %28, %c0_i32_11 : i32
    scf.if %29 {
      %cst_12 = arith.constant 0.000000e+00 : f32
      %30 = vector.broadcast %cst_12 : f32 to vector<1x8x128xf32>
      %c0_13 = arith.constant 0 : index
      %c0_14 = arith.constant 0 : index
      %31 = vector.load %arg4[%c0_13, %c0_14] : memref<20x1xf32, #tpu.memory_space<vmem>>, vector<20x1xf32>
      %32 = vector.shape_cast %31 : vector<20x1xf32> to vector<1x20x1xf32>
      %cst_15 = arith.constant dense<0.000000e+00> : vector<1xf32>
      %33 = vector.multi_reduction <add>, %32, %cst_15 [1, 2] : vector<1x20x1xf32> to vector<1xf32>
      %34 = vector.shape_cast %33 : vector<1xf32> to vector<1x1x1xf32>
      %35 = vector.extract %34[0, 0, 0] : f32 from vector<1x1x1xf32>
      %36 = vector.broadcast %35 : f32 to vector<1x8x128xf32>
      %37 = arith.addf %30, %36 : vector<1x8x128xf32>
      %c0_16 = arith.constant 0 : index
      %c0_17 = arith.constant 0 : index
      %c0_18 = arith.constant 0 : index
      %38 = vector.load %arg3[%c0_16, %c0_17, %c0_18] : memref<1x8x128xf32, #tpu.memory_space<vmem>>, vector<1x8x128xf32>
      tpu.vector_store %arg3[%c0_16, %c0_17, %c0_18], %37 {strides = array<i32>} : memref<1x8x128xf32, #tpu.memory_space<vmem>>, vector<1x8x128xf32>,
    } else {
    }
    return
  }
  func.func @transform_0(%arg0: i32, %arg1: i32) -> (i32, i32) {
    %c1_i32 = arith.constant 1 : i32
    %0 = arith.muli %arg0, %c1_i32 : i32
    %1 = arith.addi %0, %arg1 : i32
    %c0_i32 = arith.constant 0 : i32
    %2 = arith.minsi %1, %c0_i32 : i32
    %c0_i32_0 = arith.constant 0 : i32
    %c0_i32_1 = arith.constant 0 : i32
    return %2, %c0_i32_0 : i32, i32
  }
  func.func @transform_1(%arg0: i32, %arg1: i32) -> (i32, i32, i32) {
    %c0_i32 = arith.constant 0 : i32
    %c0_i32_0 = arith.constant 0 : i32
    %c0_i32_1 = arith.constant 0 : i32
    return %arg0, %c0_i32, %c0_i32_0 : i32, i32, i32
  }
}

</mosaic_0001>

<llo_original>
// kernel: tpu_custom_call.1
$region0: #{tpu_custom_call.1}
  #allocation0 [shape = 'u32[]', space=smem, size = 0x4, offset = 0x4, fixed_abs, tag = 'smem constant byte address 0x4 - core index']
  #allocation1 [shape = 'u32[144,128]{1,0:T(1,128)}', space=vmem, size = 0x12000, scoped, tag = 'internal scratch']
  #allocation2 [shape = 'f32[20,1]{1,0:T(8,128)}', space=vmem, size = 0x3000, scoped, tag = 'scratch operand']
  %s0 = inlined_call_operand.hbm [shape: f32[20,32], index: 0, kind: input, shape index: {}]
  %s1 = inlined_call_operand.hbm [shape: f32[1,8,128], index: 1, kind: output, shape index: {}]
  %s2 = sld [smem:[#allocation0]]
  $region26: #{tpu_custom_call.1} parent=0
    _
  %s4 = ssub.s32 1, %s2
  %s5 = scalar_select 0, %s4, %s2
  $region1: #{tpu_custom_call.1} parent=0
    #allocation3 [shape = 'u8[12288]{0}', space=vmem, size = 0x3000, scoped, tag = 'input window, operand 0, single buffered']
    #allocation4 [shape = 's32[1]{0}', space=sflag, size = 0x4, scoped, tag = 'scoped memory for tpu_custom_call.1']
    #allocation5 [shape = 's32[1]{0}', space=sflag, size = 0x4, scoped, tag = 'scoped memory for tpu_custom_call.1']
    #allocation6 [shape = 'u8[4096]{0}', space=vmem, size = 0x1000, scoped, tag = 'output window, operand 0, single buffered']
    %6 = vsyncpa [#allocation4], 0
    %7 = vsyncpa [#allocation5], 0
    // Predicated region
    $region2: #{tpu_custom_call.1} parent=1 // pred_check
      _
    $region3: #{tpu_custom_call.1} parent=1 // pred_check_branch
      %9 = sbr.rel (0) target = $region5
    $region4: #{tpu_custom_call.1} parent=1 // pred_region
      %s10 = sadd.s32 0, 0
      %p11 = scmp.lt.s32.totalorder %s10, 0
      %s12 = scalar_select %p11, %s10, 0
      %s13 = smul.u32 3, %s12
      %s15 = ssub.s32 384, 384
      %16 = vsyncadd [#allocation4], %s15
      %s17 = smul.addr %s13, 128
      %s18 = scalar_lea.hbm %s0, %s17
      %s19 = sshll.u32 [#allocation3], 4
      %s20 = int_to_ptr.vmem [resolvable:$true] %s19
      %25 = dma.hbm_to_vmem [thread:$0]  %s18, 384, %s20, [#allocation4], 128, 128, 8
    $region5: #{tpu_custom_call.1} parent=1 // pred_fallthru
      _
    // Predicated region
    $region6: #{tpu_custom_call.1} parent=1 // pred_check
      _
    $region7: #{tpu_custom_call.1} parent=1 // pred_check_branch
      %27 = sbr.rel (0) target = $region9
    $region8: #{tpu_custom_call.1} parent=1 // pred_region
      %28 = dma.done [#allocation4], 384
    $region9: #{tpu_custom_call.1} parent=1 // pred_fallthru
      _
    %s29 = sadd.s32 0, 0
    %p30 = scmp.lt.s32.totalorder %s29, 0
    %s31 = scalar_select %p30, %s29, 0
    %s32 = smul.u32 3, %s31
    %p33 = scmp.eq.s32.totalorder 0, 0
    // Predicated region
    $region10: #{tpu_custom_call.1} parent=1 // pred_check
      %p34 = pneg %p33
    $region11: #{tpu_custom_call.1} parent=1 // pred_check_branch
      %36 = sbr.rel (%p34) target = $region13
    $region12: #{tpu_custom_call.1} parent=1 // pred_region
      %vm37 = vcmask 7168
      %38 = vst.msk [vmem:[#allocation2] sm:$0xff] %vm37, 0.0
      %39 = vst.msk [vmem:[#allocation2 + $0x8] sm:$0xff] %vm37, 0.0
      %vm40 = vcmask 3072
      %41 = vst.msk [vmem:[#allocation2 + $0x10] sm:$0xf] %vm40, 0.0
    $region13: #{tpu_custom_call.1} parent=1 // pred_fallthru
      _
    %s42 = sadd.s32 0, 0
    %s43 = smul.u32 %s42, 20
    %v44 = vld [vmem:[#allocation3] sm:$0xff]
    %v45 = vld [vmem:[#allocation3 + $0x8] sm:$0xff]
    %v46 = vld [vmem:[#allocation3 + $0x10] sm:$0xf]
    %vm47 = vcmask 261120
    %v48 = vsel %vm47, %v44, -inf
    %49 = vmax.xlane.f32.xlu0 %v48
    %v50 = vpop.xlane.xlu0 %49
    %v51 = vsel %vm47, %v45, -inf
    %52 = vmax.xlane.f32.xlu0 %v51
    %v53 = vpop.xlane.xlu0 %52
    %vm54 = vcmask 257024
    %v55 = vsel %vm54, %v46, -inf
    %56 = vmax.xlane.f32.xlu0 %v55
    %v57 = vpop.xlane.xlu0 %56
    %v58 = vsub.f32 %v44, %v50
    %v59 = vsub.f32 %v45, %v53
    %v60 = vsub.f32 %v46, %v57
    %v61 = vmul.f32 %v58, 1.442695
    %v62 = vpow.pop %v61
    %v63 = vmul.f32 %v59, 1.442695
    %v64 = vpow.pop %v63
    %v65 = vmul.f32 %v60, 1.442695
    %v66 = vpow.pop %v65
    %v67 = vsel %vm47, %v62, 0.0
    %68 = vadd.xlane.f32.xlu0 %v67
    %v69 = vpop.xlane.xlu0 %68
    %v70 = vsel %vm47, %v64, 0.0
    %71 = vadd.xlane.f32.xlu0 %v70
    %v72 = vpop.xlane.xlu0 %71
    %v73 = vsel %vm54, %v66, 0.0
    %74 = vadd.xlane.f32.xlu0 %v73
    %v75 = vpop.xlane.xlu0 %74
    %v76 = vlog2.pop %v69
    %v77 = vmul.f32 %v76, 0.6931472
    %v78 = vlog2.pop %v72
    %v79 = vmul.f32 %v78, 0.6931472
    %v80 = vlog2.pop %v75
    %v81 = vmul.f32 %v80, 0.6931472
    %v82 = vadd.f32 %v77, %v50
    %v83 = vadd.f32 %v79, %v53
    %v84 = vadd.f32 %v81, %v57
    %v85 = vlaneseq
    %v86 = vshrl.u32 %v85, 7
    %v87 = vadd.s32 %v86, 8
    %v88 = vadd.s32 %v86, 16
    %v89 = vstv %s43
    %v90 = vadd.s32 %v89, %v86
    %v91 = vadd.s32 %v89, %v87
    %v92 = vadd.s32 %v89, %v88
    %v93 = vld [vmem:[#allocation2] sm:$0xff]
    %v94 = vld [vmem:[#allocation2 + $0x8] sm:$0xff]
    %v95 = vld [vmem:[#allocation2 + $0x10] sm:$0xf]
    %vm96 = vcmp.lt.s32.totalorder %v90, 20
    %vm97 = vcmp.lt.s32.totalorder %v91, 20
    %vm98 = vcmp.lt.s32.totalorder %v92, 20
    %v99 = vsel %vm96, %v82, 0.0
    %v100 = vsel %vm97, %v83, 0.0
    %v101 = vsel %vm98, %v84, 0.0
    %v102 = vadd.f32 %v93, %v99
    %v103 = vadd.f32 %v94, %v100
    %v104 = vadd.f32 %v95, %v101
    %vm105 = vcmask 7168
    %106 = vst.msk [vmem:[#allocation2] sm:$0xff] %vm105, %v102
    %107 = vst.msk [vmem:[#allocation2 + $0x8] sm:$0xff] %vm105, %v103
    %vm108 = vcmask 3072
    %109 = vst.msk [vmem:[#allocation2 + $0x10] sm:$0xf] %vm108, %v104
    // Predicated region
    $region14: #{tpu_custom_call.1} parent=1 // pred_check
      %p110 = pneg %p33
    $region15: #{tpu_custom_call.1} parent=1 // pred_check_branch
      %112 = sbr.rel (%p110) target = $region17
    $region16: #{tpu_custom_call.1} parent=1 // pred_region
      %v113 = vld [vmem:[#allocation2] sm:$0xff]
      %v114 = vld [vmem:[#allocation2 + $0x8] sm:$0xff]
      %v115 = vld [vmem:[#allocation2 + $0x10] sm:$0xf]
      %v116 = vsel %vm105, %v113, 0.0
      %v117 = vsel %vm105, %v114, 0.0
      %v118 = vadd.f32 %v116, %v117
      %v119 = vsel %vm108, %v115, 0.0
      %v120 = vadd.f32 %v118, %v119
      %121 = vadd.xlane.f32.xlu0 %v120
      %v122 = vpop.xlane.xlu0 %121
      %v123 = vrot.slane %v122, 4
      %v124 = vadd.f32 %v122, %v123
      %v125 = vrot.slane %v124, 2
      %v126 = vadd.f32 %v124, %v125
      %v127 = vrot.slane %v126, 1
      %v128 = vadd.f32 %v126, %v127
      %s129 = vtos %v128
      %v130 = vstv %s129
      %v131 = vadd.f32 %v130, 0.0
      %132 = vst [vmem:[#allocation6] sm:$0xff] %v131
    $region17: #{tpu_custom_call.1} parent=1 // pred_fallthru
      _
    // Predicated region
    $region18: #{tpu_custom_call.1} parent=1 // pred_check
      _
    $region19: #{tpu_custom_call.1} parent=1 // pred_check_branch
      %134 = sbr.rel (0) target = $region21
    $region20: #{tpu_custom_call.1} parent=1 // pred_region
      %s136 = ssub.s32 128, 128
      %137 = vsyncadd [#allocation5], %s136
      %s139 = sshll.u32 [#allocation6], 4
      %s140 = int_to_ptr.vmem [resolvable:$true] %s139
      %142 = dma.vmem_to_hbm [thread:$0]  %s140, 128, %s1, [#allocation5]
    $region21: #{tpu_custom_call.1} parent=1 // pred_fallthru
      _
    // Predicated region
    $region22: #{tpu_custom_call.1} parent=1 // pred_check
      _
    $region23: #{tpu_custom_call.1} parent=1 // pred_check_branch
      %144 = sbr.rel (0) target = $region25
    $region24: #{tpu_custom_call.1} parent=1 // pred_region
      %145 = dma.done [#allocation5], 128
    $region25: #{tpu_custom_call.1} parent=1 // pred_fallthru
      _
    %146 = vsyncpa [#allocation4], 1
    %147 = vsyncpa [#allocation5], 1

</llo_original>
